<compile_context>
chip_gen: v6e
topology: v6e:2x2x1
jax: 0.10.0
libtpu: 0.0.40
codegen_flags: <defaults>
</compile_context>

<pallas_src>
import jax
import jax.numpy as jnp
from jax.experimental import pallas as pl
from jax.experimental.pallas import tpu as pltpu


def _round_up(x, m):
    return ((x + m - 1) // m) * m


def _pick_tile(full, cap, unit):
    """Largest multiple-of-`unit` divisor of `full` that is <= cap (>= unit)."""
    best = unit
    d = unit
    limit = min(full, max(cap, unit))
    while d <= limit:
        if full % d == 0:
            best = d
        d += unit
    return best


# ---------------------------------------------------------------------------
# Kernels
# ---------------------------------------------------------------------------
def _linear_kernel_f32(x_ref, w_ref, b_ref, o_ref):
    """f32 output: accumulate directly into the K-resident output block."""
    k = pl.program_id(2)

    @pl.when(k == 0)
    def _init():
        # Fold the bias into the accumulator init -> no epilogue work at all.
        o_ref[...] = jnp.broadcast_to(b_ref[...], o_ref.shape)

    o_ref[...] += jnp.dot(x_ref[...], w_ref[...],
                          preferred_element_type=jnp.float32)


def _linear_kernel_acc(x_ref, w_ref, b_ref, o_ref, acc_ref):
    """Narrow output dtypes: f32 VMEM accumulator, cast on the last K step."""
    k = pl.program_id(2)

    @pl.when(k == 0)
    def _init():
        acc_ref[...] = jnp.broadcast_to(b_ref[...], acc_ref.shape)

    acc_ref[...] += jnp.dot(x_ref[...], w_ref[...],
                            preferred_element_type=jnp.float32)

    @pl.when(k == pl.num_programs(2) - 1)
    def _writeback():
        o_ref[...] = acc_ref[...].astype(o_ref.dtype)


# ---------------------------------------------------------------------------
# One-time parameter preparation (module init time, off the per-call path)
# ---------------------------------------------------------------------------
def prepare_receiver_params(weight, bias, compute_dtype=None):
    """weight: [D_out, D_in] (PyTorch layout), bias: [D_out].

    Returns (w_t, b_row, d_out):
      w_t   [Kp, Np]  weight transposed to [D_in, D_out] and padded to
                      128-aligned shapes (natural MXU [k, n] layout).
      b_row [1, Np]   float32 bias row (folded into the k==0 init).
    """
    d_out, d_in = weight.shape
    kp = _round_up(d_in, 128)
    np_ = _round_up(d_out, 128)
    w_t = jnp.transpose(weight)
    if (kp, np_) != (d_in, d_out):
        w_t = jnp.pad(w_t, ((0, kp - d_in), (0, np_ - d_out)))
    if compute_dtype is not None:
        w_t = w_t.astype(compute_dtype)
    b_row = bias.astype(jnp.float32)
    if np_ != d_out:
        b_row = jnp.pad(b_row, (0, np_ - d_out))
    return w_t, b_row.reshape(1, np_), d_out


# ---------------------------------------------------------------------------
# Forward
# ---------------------------------------------------------------------------
def receiver_forward(x, w_t, b_row, d_out, *, tm_cap=1024, tn_cap=512,
                     tk_cap=1024, compute_dtype=None, allow_xla_fallback=True):
    """Linear forward: x [B, D_in]; (w_t, b_row) from prepare_receiver_params."""
    B, D_in = x.shape
    Kp, Np = w_t.shape
    out_dtype = x.dtype

    if compute_dtype is not None:
        x = x.astype(compute_dtype)

    # --- tile selection -----------------------------------------------------
    # M: grow the tile to cover the whole (8-aligned) batch so the weight
    # streams from HBM exactly once; cap for VMEM.
    tm_cap = max(8, _round_up(tm_cap, 8))
    Mp = _round_up(B, 8)
    if Mp <= tm_cap:
        tm = Mp
    else:
        tm = tm_cap
        Mp = _round_up(B, tm)
    # N/K: largest 128-multiple divisors of the pre-padded weight dims.
    tn = _pick_tile(Np, tn_cap, 128)
    tk = _pick_tile(Kp, tk_cap, 128)

    m_grid, n_grid, k_grid = Mp // tm, Np // tn, Kp // tk

    # v7x megacore: keep the parallel (M,N) grid >= 2 blocks so both
    # TensorCores get work when the batch fits a single tile.
    if m_grid == 1 and n_grid == 1 and Np >= 256:
        tn = _pick_tile(Np, Np // 2, 128)
        n_grid = Np // tn

    # Tiny single-tile problems: plain XLA fusion beats pallas_call overhead.
    if allow_xla_fallback and m_grid * n_grid * k_grid == 1:
        xk = x if D_in == Kp else jnp.pad(x, ((0, 0), (0, Kp - D_in)))
        y = jnp.dot(xk, w_t, preferred_element_type=jnp.float32) + b_row
        return y[:, :d_out].astype(out_dtype)

    # Pad x only if the static shapes require it (weight/bias already padded).
    if (Mp, Kp) != (B, D_in):
        x = jnp.pad(x, ((0, Mp - B), (0, Kp - D_in)))

    use_scratch = out_dtype != jnp.float32
    kernel = _linear_kernel_acc if use_scratch else _linear_kernel_f32
    scratch = [pltpu.VMEM((tm, tn), jnp.float32)] if use_scratch else []

    x_bytes = jnp.dtype(x.dtype).itemsize
    w_bytes = jnp.dtype(w_t.dtype).itemsize
    o_bytes = jnp.dtype(out_dtype).itemsize
    working_set = (2 * (tm * tk * x_bytes + tk * tn * w_bytes + tn * 4)
                   + 2 * tm * tn * o_bytes
                   + (tm * tn * 4 if use_scratch else 0))
    vmem_limit = int(min(max(2 * working_set, 32 * 1024 * 1024),
                         48 * 1024 * 1024))

    cost = pl.CostEstimate(
        flops=2 * Mp * Np * Kp,
        transcendentals=0,
        bytes_accessed=Mp * Kp * x_bytes + Kp * Np * w_bytes + Mp * Np * o_bytes,
    )

    out = pl.pallas_call(
        kernel,
        out_shape=jax.ShapeDtypeStruct((Mp, Np), out_dtype),
        grid_spec=pltpu.PrefetchScalarGridSpec(
            num_scalar_prefetch=0,
            grid=(m_grid, n_grid, k_grid),
            in_specs=[
                pl.BlockSpec((tm, tk), lambda i, j, k: (i, k)),   # x   [Mp, Kp]
                pl.BlockSpec((tk, tn), lambda i, j, k: (k, j)),   # W.T [Kp, Np]
                pl.BlockSpec((1, tn), lambda i, j, k: (0, j)),    # b   [1, Np]
            ],
            out_specs=pl.BlockSpec((tm, tn), lambda i, j, k: (i, j)),
            scratch_shapes=scratch,
        ),
        compiler_params=pltpu.CompilerParams(
            dimension_semantics=("parallel", "parallel", "arbitrary"),
            vmem_limit_bytes=vmem_limit,
        ),
        cost_estimate=cost,
    )(x, w_t, b_row)

    if (Mp, Np) != (B, d_out):
        out = out[:B, :d_out]
    return out


if __name__ == "__main__":
    # Shapes consistent with the module's forward (H is unused by forward).
    B, D_in, H, D_out = 2, 32, 64, 16

    key = jax.random.PRNGKey(0)
    k_x, k_w, k_b, k_x2, k_w2, k_b2 = jax.random.split(key, 6)

    bound = 1.0 / (D_in ** 0.5)
    x = jax.random.normal(k_x, (B, D_in), dtype=jnp.float32)
    weight = jax.random.uniform(k_w, (D_out, D_in), jnp.float32, -bound, bound)
    bias = jax.random.uniform(k_b, (D_out,), jnp.float32, -bound, bound)

    # One-time parameter preparation (transpose + pad), off the per-call path.
    w_t, b_row, _ = prepare_receiver_params(weight, bias)

    fwd = jax.jit(
        receiver_forward,
        static_argnames=("d_out", "tm_cap", "tn_cap", "tk_cap",
                         "compute_dtype", "allow_xla_fallback"),
    )

    ref = jnp.dot(x, weight.T, precision=jax.lax.Precision.HIGHEST) + bias

    # 1) Force the Pallas path even on the tiny single-tile toy problem.
    out_pallas = fwd(x, w_t, b_row, d_out=D_out, allow_xla_fallback=False)
    jax.block_until_ready(out_pallas)
    assert out_pallas.shape == (B, D_out)
    assert jnp.allclose(out_pallas, ref, atol=1e-5, rtol=1e-5)

    # 2) Default path: tiny single-tile grid takes the cheap XLA fallback.
    out_small = fwd(x, w_t, b_row, d_out=D_out)
    jax.block_until_ready(out_small)
    assert out_small.shape == (B, D_out)
    assert jnp.allclose(out_small, ref, atol=1e-5, rtol=1e-5)

    # 3) Realistic size exercising the tiled Pallas grid
    #    (tm=512 covers the batch -> weight streamed once; tn=384 -> grid (1,2,1)).
    B2, D_in2, D_out2 = 512, 1024, 768
    bound2 = 1.0 / (D_in2 ** 0.5)
    x2 = jax.random.normal(k_x2, (B2, D_in2), dtype=jnp.float32)
    w2 = jax.random.uniform(k_w2, (D_out2, D_in2), jnp.float32, -bound2, bound2)
    b2 = jax.random.uniform(k_b2, (D_out2,), jnp.float32, -bound2, bound2)
    w2_t, b2_row, _ = prepare_receiver_params(w2, b2)

    out2 = fwd(x2, w2_t, b2_row, d_out=D_out2)
    jax.block_until_ready(out2)
    ref2 = jnp.dot(x2, w2.T, precision=jax.lax.Precision.HIGHEST) + b2
    assert out2.shape == (B2, D_out2)
    # Kernel uses default MXU f32 precision (bf16 multi-pass); tolerance documents it.
    assert jnp.allclose(out2, ref2, atol=1e-3, rtol=1e-3)

    print("KERNEL_OK")
</pallas_src>

<mosaic_0001>
module attributes {stable_mosaic.version = 11 : i64} {
  func.func @_linear_kernel_f32(%arg0: i32, %arg1: i32, %arg2: i32, %arg3: memref<8x128xf32, #tpu.memory_space<vmem>>, %arg4: memref<128x128xf32, #tpu.memory_space<vmem>>, %arg5: memref<1x128xf32, #tpu.memory_space<vmem>>, %arg6: memref<8x128xf32, #tpu.memory_space<vmem>>) attributes {dimension_semantics = [#tpu.dimension_semantics<parallel>, #tpu.dimension_semantics<parallel>, #tpu.dimension_semantics<arbitrary>], iteration_bounds = array<i64: 1, 1, 1>, scalar_prefetch = 0 : i64, scratch_operands = 0 : i64, tpu.core_type = #tpu.core_type<tc>, window_params = [{transform_indices = @transform_0, window_bounds = array<i64: 8, 128>}, {transform_indices = @transform_1, window_bounds = array<i64: 128, 128>}, {transform_indices = @transform_2, window_bounds = array<i64: 1, 128>}, {transform_indices = @transform_3, window_bounds = array<i64: 8, 128>}]} {
    %c0_i32 = arith.constant 0 : i32
    %0 = arith.cmpi eq, %arg2, %c0_i32 : i32
    %1 = arith.extui %0 : i1 to i32
    %c0_i32_0 = arith.constant 0 : i32
    %2 = arith.cmpi ne, %1, %c0_i32_0 : i32
    scf.if %2 {
      %c0_8 = arith.constant 0 : index
      %c0_9 = arith.constant 0 : index
      %9 = vector.load %arg5[%c0_8, %c0_9] : memref<1x128xf32, #tpu.memory_space<vmem>>, vector<1x128xf32>
      %10 = vector.shape_cast %9 : vector<1x128xf32> to vector<1x128xf32>
      %11 = vector.broadcast %10 : vector<1x128xf32> to vector<8x128xf32>
      %c0_10 = arith.constant 0 : index
      %c0_11 = arith.constant 0 : index
      %12 = vector.load %arg6[%c0_10, %c0_11] : memref<8x128xf32, #tpu.memory_space<vmem>>, vector<8x128xf32>
      tpu.vector_store %arg6[%c0_10, %c0_11], %11 {strides = array<i32>} : memref<8x128xf32, #tpu.memory_space<vmem>>, vector<8x128xf32>,
    } else {
    }
    %c0 = arith.constant 0 : index
    %c0_1 = arith.constant 0 : index
    %3 = vector.load %arg6[%c0, %c0_1] : memref<8x128xf32, #tpu.memory_space<vmem>>, vector<8x128xf32>
    %c0_2 = arith.constant 0 : index
    %c0_3 = arith.constant 0 : index
    %4 = vector.load %arg3[%c0_2, %c0_3] : memref<8x128xf32, #tpu.memory_space<vmem>>, vector<8x128xf32>
    %c0_4 = arith.constant 0 : index
    %c0_5 = arith.constant 0 : index
    %5 = vector.load %arg4[%c0_4, %c0_5] : memref<128x128xf32, #tpu.memory_space<vmem>>, vector<128x128xf32>
    %cst = arith.constant dense<0.000000e+00> : vector<8x128xf32>
    %6 = tpu.matmul %4, %5, %cst {dimension_numbers = #tpu.dot_dimension_numbers<[1], [0], [0], [1], [0, 0, 1, 1], [], []>} : vector<8x128xf32>, vector<128x128xf32>, vector<8x128xf32> -> vector<8x128xf32>
    %7 = arith.addf %3, %6 : vector<8x128xf32>
    %c0_6 = arith.constant 0 : index
    %c0_7 = arith.constant 0 : index
    %8 = vector.load %arg6[%c0_6, %c0_7] : memref<8x128xf32, #tpu.memory_space<vmem>>, vector<8x128xf32>
    tpu.vector_store %arg6[%c0_6, %c0_7], %7 {strides = array<i32>} : memref<8x128xf32, #tpu.memory_space<vmem>>, vector<8x128xf32>,
    return
  }
  func.func @transform_0(%arg0: i32, %arg1: i32, %arg2: i32) -> (i32, i32) {
    %c0_i32 = arith.constant 0 : i32
    return %arg0, %arg2 : i32, i32
  }
  func.func @transform_1(%arg0: i32, %arg1: i32, %arg2: i32) -> (i32, i32) {
    %c0_i32 = arith.constant 0 : i32
    return %arg2, %arg1 : i32, i32
  }
  func.func @transform_2(%arg0: i32, %arg1: i32, %arg2: i32) -> (i32, i32) {
    %c0_i32 = arith.constant 0 : i32
    %c0_i32_0 = arith.constant 0 : i32
    return %c0_i32, %arg1 : i32, i32
  }
  func.func @transform_3(%arg0: i32, %arg1: i32, %arg2: i32) -> (i32, i32) {
    %c0_i32 = arith.constant 0 : i32
    return %arg0, %arg1 : i32, i32
  }
}

</mosaic_0001>

<llo_original>
// kernel: receiver_forward.1
$region0: #{receiver_forward.1}
  #allocation0 [shape = 'u32[]', space=smem, size = 0x4, offset = 0x4, fixed_abs, tag = 'smem constant byte address 0x4 - core index']
  #allocation1 [shape = 'u32[144,128]{1,0:T(1,128)}', space=vmem, size = 0x12000, scoped, tag = 'internal scratch']
  %s0 = inlined_call_operand.vmem [shape: f32[8,128], index: 0, kind: input, shape index: {}]
  %s1 = inlined_call_operand.hbm [shape: f32[128,128], index: 1, kind: input, shape index: {}]
  %s2 = inlined_call_operand.vmem [shape: f32[1,128], index: 2, kind: input, shape index: {}]
  %s3 = inlined_call_operand.vmem [shape: f32[8,128], index: 3, kind: output, shape index: {}]
  %s4 = sld [smem:[#allocation0]]
  $region30: #{receiver_forward.1} parent=0
    _
  %s6 = ssub.s32 1, %s4
  %s7 = scalar_select 0, %s6, %s4
  $region1: #{receiver_forward.1} parent=0
    #allocation2 [shape = 'u8[65536]{0}', space=vmem, size = 0x10000, scoped, tag = 'input window, operand 1, single buffered']
    #allocation3 [shape = 's32[1]{0}', space=sflag, size = 0x4, scoped, tag = 'scoped memory for receiver_forward.1']
    %8 = vsyncpa [#allocation3], 0
    // Predicated region
    $region2: #{receiver_forward.1} parent=1 // pred_check
      _
    $region3: #{receiver_forward.1} parent=1 // pred_check_branch
      %10 = sbr.rel (0) target = $region5
    $region4: #{receiver_forward.1} parent=1 // pred_region
      _
    $region5: #{receiver_forward.1} parent=1 // pred_fallthru
      _
    // Predicated region
    $region6: #{receiver_forward.1} parent=1 // pred_check
      _
    $region7: #{receiver_forward.1} parent=1 // pred_check_branch
      %12 = sbr.rel (0) target = $region9
    $region8: #{receiver_forward.1} parent=1 // pred_region
      %s14 = ssub.s32 2048, 2048
      %15 = vsyncadd [#allocation3], %s14
      %s16 = sshll.u32 [#allocation2], 4
      %s17 = int_to_ptr.vmem [resolvable:$true] %s16
      %22 = dma.hbm_to_vmem [thread:$0]  %s1, 2048, %s17, [#allocation3], 128, 128, 8
    $region9: #{receiver_forward.1} parent=1 // pred_fallthru
      _
    // Predicated region
    $region10: #{receiver_forward.1} parent=1 // pred_check
      _
    $region11: #{receiver_forward.1} parent=1 // pred_check_branch
      %24 = sbr.rel (0) target = $region13
    $region12: #{receiver_forward.1} parent=1 // pred_region
      _
    $region13: #{receiver_forward.1} parent=1 // pred_fallthru
      _
    // Predicated region
    $region14: #{receiver_forward.1} parent=1 // pred_check
      _
    $region15: #{receiver_forward.1} parent=1 // pred_check_branch
      %26 = sbr.rel (0) target = $region17
    $region16: #{receiver_forward.1} parent=1 // pred_region
      %27 = dma.done [#allocation3], 2048
    $region17: #{receiver_forward.1} parent=1 // pred_fallthru
      _
    %p28 = scmp.eq.s32.totalorder 0, 0
    // Predicated region
    $region18: #{receiver_forward.1} parent=1 // pred_check
      %p29 = pneg %p28
    $region19: #{receiver_forward.1} parent=1 // pred_check_branch
      %31 = sbr.rel (%p29) target = $region21
    $region20: #{receiver_forward.1} parent=1 // pred_region
      %v32 = vld [vmem:[%s2] sm:$0x1]
      %v34 = vlaneseq
      %v35 = vshrl.u32 %v34, 7
      %v36 = vsub.s32 0, %v35
      %v37 = vrot.slane %v32, %v36
      %39 = vst [vmem:[%s3] sm:$0xff] %v37
    $region21: #{receiver_forward.1} parent=1 // pred_fallthru
      _
    %v40 = vld [vmem:[%s3] sm:$0xff]
    %v41 = vld [vmem:[%s0] sm:$0xff]
    %v42 = vld [vmem:[#allocation2] sm:$0xff]
    %v43 = vld [vmem:[#allocation2 + $0x8] sm:$0xff]
    %v44 = vld [vmem:[#allocation2 + $0x10] sm:$0xff]
    %v45 = vld [vmem:[#allocation2 + $0x18] sm:$0xff]
    %v46 = vld [vmem:[#allocation2 + $0x20] sm:$0xff]
    %v47 = vld [vmem:[#allocation2 + $0x28] sm:$0xff]
    %v48 = vld [vmem:[#allocation2 + $0x30] sm:$0xff]
    %v49 = vld [vmem:[#allocation2 + $0x38] sm:$0xff]
    %v50 = vld [vmem:[#allocation2 + $0x40] sm:$0xff]
    %v51 = vld [vmem:[#allocation2 + $0x48] sm:$0xff]
    %v52 = vld [vmem:[#allocation2 + $0x50] sm:$0xff]
    %v53 = vld [vmem:[#allocation2 + $0x58] sm:$0xff]
    %v54 = vld [vmem:[#allocation2 + $0x60] sm:$0xff]
    %v55 = vld [vmem:[#allocation2 + $0x68] sm:$0xff]
    %v56 = vld [vmem:[#allocation2 + $0x70] sm:$0xff]
    %v57 = vld [vmem:[#allocation2 + $0x78] sm:$0xff]
    %58 = vmatprep.subr.mxu0 0.0
    %59 = vmatpush1.msra.mxu0 %v57
    %60 = vmatprep.subr.mxu0 0.0
    %61 = vmatpush1.msra.mxu0 %v56
    %62 = vmatprep.subr.mxu0 0.0
    %63 = vmatpush1.msra.mxu0 %v55
    %64 = vmatprep.subr.mxu0 0.0
    %65 = vmatpush1.msra.mxu0 %v54
    %66 = vmatprep.subr.mxu0 0.0
    %67 = vmatpush1.msra.mxu0 %v53
    %68 = vmatprep.subr.mxu0 0.0
    %69 = vmatpush1.msra.mxu0 %v52
    %70 = vmatprep.subr.mxu0 0.0
    %71 = vmatpush1.msra.mxu0 %v51
    %72 = vmatprep.subr.mxu0 0.0
    %73 = vmatpush1.msra.mxu0 %v50
    %74 = vmatprep.subr.mxu0 0.0
    %75 = vmatpush1.msra.mxu0 %v49
    %76 = vmatprep.subr.mxu0 0.0
    %77 = vmatpush1.msra.mxu0 %v48
    %78 = vmatprep.subr.mxu0 0.0
    %79 = vmatpush1.msra.mxu0 %v47
    %80 = vmatprep.subr.mxu0 0.0
    %81 = vmatpush1.msra.mxu0 %v46
    %82 = vmatprep.subr.mxu0 0.0
    %83 = vmatpush1.msra.mxu0 %v45
    %84 = vmatprep.subr.mxu0 0.0
    %85 = vmatpush1.msra.mxu0 %v44
    %86 = vmatprep.subr.mxu0 0.0
    %87 = vmatpush1.msra.mxu0 %v43
    %88 = vmatprep.subr.mxu0 0.0
    %89 = vmatpush1.msra.mxu0 %v42
    %90 = vmatprep.subr.mxu0 0.0
    %91 = vmatpush2.msra.mxu0 0.0
    %92 = vmatprep.subr.mxu0 0.0
    %93 = vmatpush2.msra.mxu0 0.0
    %94 = vmatprep.subr.mxu0 0.0
    %95 = vmatpush2.msra.mxu0 0.0
    %96 = vmatprep.subr.mxu0 0.0
    %97 = vmatpush2.msra.mxu0 0.0
    %98 = vmatprep.subr.mxu0 0.0
    %99 = vmatpush2.msra.mxu0 0.0
    %100 = vmatprep.subr.mxu0 0.0
    %101 = vmatpush2.msra.mxu0 0.0
    %102 = vmatprep.subr.mxu0 0.0
    %103 = vmatpush2.msra.mxu0 0.0
    %104 = vmatprep.subr.mxu0 0.0
    %105 = vmatpush2.msra.mxu0 0.0
    %106 = vmatprep.subr.mxu0 0.0
    %107 = vmatpush2.msra.mxu0 0.0
    %108 = vmatprep.subr.mxu0 0.0
    %109 = vmatpush2.msra.mxu0 0.0
    %110 = vmatprep.subr.mxu0 0.0
    %111 = vmatpush2.msra.mxu0 0.0
    %112 = vmatprep.subr.mxu0 0.0
    %113 = vmatpush2.msra.mxu0 0.0
    %114 = vmatprep.subr.mxu0 0.0
    %115 = vmatpush2.msra.mxu0 0.0
    %116 = vmatprep.subr.mxu0 0.0
    %117 = vmatpush2.msra.mxu0 0.0
    %118 = vmatprep.subr.mxu0 0.0
    %119 = vmatpush2.msra.mxu0 0.0
    %120 = vmatprep.subr.mxu0 0.0
    %121 = vmatpush2.msra.mxu0 0.0
    %122 = vmatprep.mubr.f32.mxu0 0.0
    %123 = vmatmul.mubr.f32.gmra.mxu0 %v41
    %v124 = vpop.f32.mrf.mxu0
    %v125 = vadd.f32 0.0, %v124
    %v126 = vpop.f32.mrf.mxu0
    %127 = vdwg.mxu0
    %v128 = vadd.f32 %v40, %v125
    %129 = vst [vmem:[%s3] sm:$0xff] %v128
    // Predicated region
    $region22: #{receiver_forward.1} parent=1 // pred_check
      _
    $region23: #{receiver_forward.1} parent=1 // pred_check_branch
      %131 = sbr.rel (0) target = $region25
    $region24: #{receiver_forward.1} parent=1 // pred_region
      _
    $region25: #{receiver_forward.1} parent=1 // pred_fallthru
      _
    // Predicated region
    $region26: #{receiver_forward.1} parent=1 // pred_check
      _
    $region27: #{receiver_forward.1} parent=1 // pred_check_branch
      %133 = sbr.rel (0) target = $region29
    $region28: #{receiver_forward.1} parent=1 // pred_region
      _
    $region29: #{receiver_forward.1} parent=1 // pred_fallthru
      _
    %134 = vsyncpa [#allocation3], 1

</llo_original>
